<compile_context>
chip_gen: v7x
topology: tpu7x:2x2x1
jax: 0.10.0
libtpu: 0.0.40
codegen_flags: <defaults>
</compile_context>

<pallas_src>
import functools

import jax
import jax.numpy as jnp
from jax.experimental import pallas as pl
from jax.experimental.pallas import tpu as pltpu

LANE = 128      # lane granularity: feature dim padded to a multiple of this
SUBLANE = 8     # sublane granularity for the batch tile
VMEM_BUDGET = 32 * 1024 * 1024   # conservative default scoped-VMEM budget


def _round_up(x, m):
    return (x + m - 1) // m * m


def mini_nn_kernel(x_ref, w1t_ref, b1_ref, w2t_ref, b2_ref, o_ref):
    # fc1 on the MXU: bf16 inputs, f32 accumulation.
    x = x_ref[...].astype(w1t_ref.dtype)
    h = jnp.dot(x, w1t_ref[...], preferred_element_type=jnp.float32)
    h = jnp.maximum(h + b1_ref[...], 0.0)            # bias + ReLU in f32 (VPU)
    # fc2 on the MXU (h cast to bf16 only at the dot boundary).
    y = jnp.dot(h.astype(w2t_ref.dtype), w2t_ref[...],
                preferred_element_type=jnp.float32)
    o_ref[...] = (y + b2_ref[...]).astype(o_ref.dtype)


def prepare_params(w1, b1, w2, b2, matmul_dtype=jnp.bfloat16):
    """One-time (init-time) parameter prep — NOT in the per-call hot path.

    torch.nn.Linear layout (out_features, in_features) is transposed to (in, out),
    zero-padded to a lane-dense DP x DP, and cast to the MXU dtype.  Biases are
    padded to (1, DP) f32 rows (padding is zero, so padded output columns are 0)."""
    D = w1.shape[0]
    DP = _round_up(D, LANE)

    def pad_w(w):  # (out, in) -> padded W^T of shape (DP, DP)
        return jnp.zeros((DP, DP), matmul_dtype).at[:D, :D].set(
            w.T.astype(matmul_dtype))

    def pad_b(b):
        return jnp.zeros((1, DP), jnp.float32).at[0, :D].set(b.astype(jnp.float32))

    return dict(w1t=pad_w(w1), b1=pad_b(b1), w2t=pad_w(w2), b2=pad_b(b2), d=D, dp=DP)


def _pick_batch_tile(B, DP, weight_bytes):
    """Largest batch tile (multiple of 8, capped at 512) whose double-buffered
    x/out tiles plus the resident weights fit the VMEM budget."""
    tm = min(512, _round_up(B, SUBLANE))
    while tm > SUBLANE:
        # 2x buffering for x and out tiles (f32), weights assumed single-buffered
        # but count them twice to stay conservative.
        est = 2 * weight_bytes + 2 * (2 * tm * DP * 4)
        if est < VMEM_BUDGET:
            break
        tm //= 2
    return max(tm, SUBLANE)


@functools.partial(jax.jit, static_argnames=("D", "DP", "tm"))
def _forward_impl(x, w1t, b1, w2t, b2, *, D, DP, tm):
    B = x.shape[0]
    BP = _round_up(B, tm)

    xp = x
    if (BP, DP) != (B, D):
        xp = jnp.zeros((BP, DP), x.dtype).at[:B, :D].set(x)

    out = pl.pallas_call(
        mini_nn_kernel,
        out_shape=jax.ShapeDtypeStruct((BP, DP), jnp.float32),
        grid_spec=pltpu.PrefetchScalarGridSpec(
            num_scalar_prefetch=0,
            grid=(BP // tm,),
            in_specs=[
                pl.BlockSpec((tm, DP), lambda i: (i, 0)),   # x: streamed per batch tile
                pl.BlockSpec((DP, DP), lambda i: (0, 0)),   # W1^T: VMEM-resident
                pl.BlockSpec((1, DP), lambda i: (0, 0)),    # b1:   VMEM-resident
                pl.BlockSpec((DP, DP), lambda i: (0, 0)),   # W2^T: VMEM-resident
                pl.BlockSpec((1, DP), lambda i: (0, 0)),    # b2:   VMEM-resident
            ],
            out_specs=pl.BlockSpec((tm, DP), lambda i: (i, 0)),
        ),
        compiler_params=pltpu.CompilerParams(
            dimension_semantics=("parallel",)),  # batch axis sharded across v7x's 2 TCs
    )(xp, w1t, b1, w2t, b2)

    return out[:B, :D]


def mini_nn_forward(x, params):
    """x: (B, D) float32.  Returns (B, D) float32, matching fc2(relu(fc1(x)))."""
    D, DP = params["d"], params["dp"]
    B = x.shape[0]

    weight_bytes = 2 * DP * DP * params["w1t"].dtype.itemsize
    # TODO(synk): for DP so large that even a SUBLANE batch tile + the two resident
    # DPxDP weights exceed VMEM, add a K/N-tiled grid with a VMEM f32 accumulator.
    tm = _pick_batch_tile(B, DP, weight_bytes)

    return _forward_impl(x, params["w1t"], params["b1"], params["w2t"], params["b2"],
                         D=D, DP=DP, tm=tm)


def _torch_linear_init(key, out_features, in_features):
    """Deterministic init matching torch.nn.Linear's uniform(-1/sqrt(fan_in), ...)."""
    kw, kb = jax.random.split(key)
    bound = 1.0 / jnp.sqrt(in_features)
    w = jax.random.uniform(kw, (out_features, in_features), jnp.float32, -bound, bound)
    b = jax.random.uniform(kb, (out_features,), jnp.float32, -bound, bound)
    return w, b


if __name__ == "__main__":
    B, D = 8, 32
    key = jax.random.PRNGKey(0)
    kx, k1, k2 = jax.random.split(key, 3)

    x = jax.random.normal(kx, (B, D), jnp.float32)
    w1, b1 = _torch_linear_init(k1, D, D)
    w2, b2 = _torch_linear_init(k2, D, D)

    params = prepare_params(w1, b1, w2, b2)        # one-time prep (pad/transpose/bf16)
    out = mini_nn_forward(x, params)
    jax.block_until_ready(out)

    # Reference in plain f32 JAX (same semantics as the torch module).  bf16 MXU
    # inputs with f32 accumulation -> ~1e-2-level relative error vs the f32 reference.
    ref = jnp.maximum(x @ w1.T + b1, 0.0) @ w2.T + b2
    assert out.shape == ref.shape
    assert jnp.allclose(out, ref, atol=5e-2, rtol=5e-2), "mismatch vs reference"

    print("KERNEL_OK")
</pallas_src>

<mosaic_0001>
module attributes {stable_mosaic.version = 11 : i64} {
  func.func @mini_nn_kernel(%arg0: i32, %arg1: memref<8x128xf32, #tpu.memory_space<vmem>>, %arg2: memref<128x128xbf16, #tpu.memory_space<vmem>>, %arg3: memref<1x128xf32, #tpu.memory_space<vmem>>, %arg4: memref<128x128xbf16, #tpu.memory_space<vmem>>, %arg5: memref<1x128xf32, #tpu.memory_space<vmem>>, %arg6: memref<8x128xf32, #tpu.memory_space<vmem>>) attributes {dimension_semantics = [#tpu.dimension_semantics<parallel>], iteration_bounds = array<i64: 1>, scalar_prefetch = 0 : i64, scratch_operands = 0 : i64, tpu.core_type = #tpu.core_type<tc>, window_params = [{transform_indices = @transform_0, window_bounds = array<i64: 8, 128>}, {pipeline_mode = #tpu.pipeline_mode<synchronous>, transform_indices = @transform_1, window_bounds = array<i64: 128, 128>}, {pipeline_mode = #tpu.pipeline_mode<synchronous>, transform_indices = @transform_2, window_bounds = array<i64: 1, 128>}, {pipeline_mode = #tpu.pipeline_mode<synchronous>, transform_indices = @transform_3, window_bounds = array<i64: 128, 128>}, {pipeline_mode = #tpu.pipeline_mode<synchronous>, transform_indices = @transform_4, window_bounds = array<i64: 1, 128>}, {transform_indices = @transform_5, window_bounds = array<i64: 8, 128>}]} {
    %c0 = arith.constant 0 : index
    %c0_0 = arith.constant 0 : index
    %0 = vector.load %arg1[%c0, %c0_0] : memref<8x128xf32, #tpu.memory_space<vmem>>, vector<8x128xf32>
    %1 = arith.truncf %0 : vector<8x128xf32> to vector<8x128xbf16>
    %c0_1 = arith.constant 0 : index
    %c0_2 = arith.constant 0 : index
    %2 = vector.load %arg2[%c0_1, %c0_2] : memref<128x128xbf16, #tpu.memory_space<vmem>>, vector<128x128xbf16>
    %cst = arith.constant dense<0.000000e+00> : vector<8x128xf32>
    %3 = tpu.matmul %1, %2, %cst {dimension_numbers = #tpu.dot_dimension_numbers<[1], [0], [0], [1], [0, 0, 1, 1], [], []>} : vector<8x128xbf16>, vector<128x128xbf16>, vector<8x128xf32> -> vector<8x128xf32>
    %c0_3 = arith.constant 0 : index
    %c0_4 = arith.constant 0 : index
    %4 = vector.load %arg3[%c0_3, %c0_4] : memref<1x128xf32, #tpu.memory_space<vmem>>, vector<1x128xf32>
    %5 = vector.broadcast %4 : vector<1x128xf32> to vector<8x128xf32>
    %6 = arith.addf %3, %5 : vector<8x128xf32>
    %cst_5 = arith.constant 0.000000e+00 : f32
    %7 = vector.broadcast %cst_5 : f32 to vector<8x128xf32>
    %8 = arith.maximumf %6, %7 : vector<8x128xf32>
    %9 = arith.truncf %8 : vector<8x128xf32> to vector<8x128xbf16>
    %c0_6 = arith.constant 0 : index
    %c0_7 = arith.constant 0 : index
    %10 = vector.load %arg4[%c0_6, %c0_7] : memref<128x128xbf16, #tpu.memory_space<vmem>>, vector<128x128xbf16>
    %cst_8 = arith.constant dense<0.000000e+00> : vector<8x128xf32>
    %11 = tpu.matmul %9, %10, %cst_8 {dimension_numbers = #tpu.dot_dimension_numbers<[1], [0], [0], [1], [0, 0, 1, 1], [], []>} : vector<8x128xbf16>, vector<128x128xbf16>, vector<8x128xf32> -> vector<8x128xf32>
    %c0_9 = arith.constant 0 : index
    %c0_10 = arith.constant 0 : index
    %12 = vector.load %arg5[%c0_9, %c0_10] : memref<1x128xf32, #tpu.memory_space<vmem>>, vector<1x128xf32>
    %13 = vector.broadcast %12 : vector<1x128xf32> to vector<8x128xf32>
    %14 = arith.addf %11, %13 : vector<8x128xf32>
    %c0_11 = arith.constant 0 : index
    %c0_12 = arith.constant 0 : index
    %15 = vector.load %arg6[%c0_11, %c0_12] : memref<8x128xf32, #tpu.memory_space<vmem>>, vector<8x128xf32>
    tpu.vector_store %arg6[%c0_11, %c0_12], %14 {strides = array<i32>} : memref<8x128xf32, #tpu.memory_space<vmem>>, vector<8x128xf32>,
    return
  }
  func.func @transform_0(%arg0: i32) -> (i32, i32) {
    %c0_i32 = arith.constant 0 : i32
    %c0_i32_0 = arith.constant 0 : i32
    return %arg0, %c0_i32 : i32, i32
  }
  func.func @transform_1(%arg0: i32) -> (i32, i32) {
    %c0_i32 = arith.constant 0 : i32
    %c0_i32_0 = arith.constant 0 : i32
    %c0_i32_1 = arith.constant 0 : i32
    return %c0_i32, %c0_i32_0 : i32, i32
  }
  func.func @transform_2(%arg0: i32) -> (i32, i32) {
    %c0_i32 = arith.constant 0 : i32
    %c0_i32_0 = arith.constant 0 : i32
    %c0_i32_1 = arith.constant 0 : i32
    return %c0_i32, %c0_i32_0 : i32, i32
  }
  func.func @transform_3(%arg0: i32) -> (i32, i32) {
    %c0_i32 = arith.constant 0 : i32
    %c0_i32_0 = arith.constant 0 : i32
    %c0_i32_1 = arith.constant 0 : i32
    return %c0_i32, %c0_i32_0 : i32, i32
  }
  func.func @transform_4(%arg0: i32) -> (i32, i32) {
    %c0_i32 = arith.constant 0 : i32
    %c0_i32_0 = arith.constant 0 : i32
    %c0_i32_1 = arith.constant 0 : i32
    return %c0_i32, %c0_i32_0 : i32, i32
  }
  func.func @transform_5(%arg0: i32) -> (i32, i32) {
    %c0_i32 = arith.constant 0 : i32
    %c0_i32_0 = arith.constant 0 : i32
    return %arg0, %c0_i32 : i32, i32
  }
}

</mosaic_0001>

<llo_original>
// kernel: _forward_impl.1
$region0: #{_forward_impl.1}
  #allocation0 [shape = 'u32[]', space=smem, size = 0x4, offset = 0x4, fixed_abs, tag = 'smem constant byte address 0x4 - core index']
  #allocation1 [shape = 'u32[144,128]{1,0:T(1,128)}', space=vmem, size = 0x12000, scoped, tag = 'internal scratch']
  %s0 = inlined_call_operand.vmem [shape: f32[8,128], index: 0, kind: input, shape index: {}]
  %s1 = inlined_call_operand.hbm [shape: bf16[128,128], index: 1, kind: input, shape index: {}]
  %s2 = inlined_call_operand.vmem [shape: f32[1,128], index: 2, kind: input, shape index: {}]
  %s3 = inlined_call_operand.hbm [shape: bf16[128,128], index: 3, kind: input, shape index: {}]
  %s4 = inlined_call_operand.vmem [shape: f32[1,128], index: 4, kind: input, shape index: {}]
  %s5 = inlined_call_operand.hbm [shape: f32[8,128], index: 5, kind: output, shape index: {}]
  %s6 = sld [smem:[#allocation0]]
  $region38: #{_forward_impl.1} parent=0
    _
  %s8 = ssub.s32 1, %s6
  %s9 = scalar_select 0, %s8, %s6
  $region1: #{_forward_impl.1} parent=0
    #allocation2 [shape = 'u8[32768]{0}', space=vmem, size = 0x8000, scoped, tag = 'input window, operand 1, single buffered']
    #allocation3 [shape = 's32[1]{0}', space=sflag, size = 0x4, scoped, tag = 'scoped memory for _forward_impl.1']
    #allocation4 [shape = 's32[1]{0}', space=sflag, size = 0x4, scoped, tag = 'scoped memory for _forward_impl.1']
    #allocation5 [shape = 'u8[32768]{0}', space=vmem, size = 0x8000, scoped, tag = 'input window, operand 3, single buffered']
    #allocation6 [shape = 's32[1]{0}', space=sflag, size = 0x4, scoped, tag = 'scoped memory for _forward_impl.1']
    #allocation7 [shape = 'u8[4096]{0}', space=vmem, size = 0x1000, scoped, tag = 'output window, operand 0, single buffered']
    %10 = vsyncpa [#allocation3], 0
    %11 = vsyncpa [#allocation6], 0
    %12 = vsyncpa [#allocation4], 0
    // Predicated region
    $region2: #{_forward_impl.1} parent=1 // pred_check
      _
    $region3: #{_forward_impl.1} parent=1 // pred_check_branch
      %14 = sbr.rel (0) target = $region5
    $region4: #{_forward_impl.1} parent=1 // pred_region
      _
    $region5: #{_forward_impl.1} parent=1 // pred_fallthru
      _
    // Predicated region
    $region6: #{_forward_impl.1} parent=1 // pred_check
      _
    $region7: #{_forward_impl.1} parent=1 // pred_check_branch
      %16 = sbr.rel (0) target = $region9
    $region8: #{_forward_impl.1} parent=1 // pred_region
      %s18 = ssub.s32 1024, 1024
      %19 = vsyncadd [#allocation3], %s18
      %s20 = sshll.u32 [#allocation2], 4
      %s21 = int_to_ptr.vmem [resolvable:$true] %s20
      %26 = dma.hbm_to_vmem [thread:$0]  %s1, 1024, %s21, [#allocation3], 64, 64, 4
    $region9: #{_forward_impl.1} parent=1 // pred_fallthru
      _
    // Predicated region
    $region10: #{_forward_impl.1} parent=1 // pred_check
      _
    $region11: #{_forward_impl.1} parent=1 // pred_check_branch
      %28 = sbr.rel (0) target = $region13
    $region12: #{_forward_impl.1} parent=1 // pred_region
      _
    $region13: #{_forward_impl.1} parent=1 // pred_fallthru
      _
    // Predicated region
    $region14: #{_forward_impl.1} parent=1 // pred_check
      _
    $region15: #{_forward_impl.1} parent=1 // pred_check_branch
      %30 = sbr.rel (0) target = $region17
    $region16: #{_forward_impl.1} parent=1 // pred_region
      %s32 = ssub.s32 1024, 1024
      %33 = vsyncadd [#allocation6], %s32
      %s34 = sshll.u32 [#allocation5], 4
      %s35 = int_to_ptr.vmem [resolvable:$true] %s34
      %40 = dma.hbm_to_vmem [thread:$0]  %s3, 1024, %s35, [#allocation6], 64, 64, 4
    $region17: #{_forward_impl.1} parent=1 // pred_fallthru
      _
    // Predicated region
    $region18: #{_forward_impl.1} parent=1 // pred_check
      _
    $region19: #{_forward_impl.1} parent=1 // pred_check_branch
      %42 = sbr.rel (0) target = $region21
    $region20: #{_forward_impl.1} parent=1 // pred_region
      _
    $region21: #{_forward_impl.1} parent=1 // pred_fallthru
      _
    // Predicated region
    $region22: #{_forward_impl.1} parent=1 // pred_check
      _
    $region23: #{_forward_impl.1} parent=1 // pred_check_branch
      %44 = sbr.rel (0) target = $region25
    $region24: #{_forward_impl.1} parent=1 // pred_region
      %45 = dma.done [#allocation3], 1024
    $region25: #{_forward_impl.1} parent=1 // pred_fallthru
      _
    // Predicated region
    $region26: #{_forward_impl.1} parent=1 // pred_check
      _
    $region27: #{_forward_impl.1} parent=1 // pred_check_branch
      %47 = sbr.rel (0) target = $region29
    $region28: #{_forward_impl.1} parent=1 // pred_region
      %48 = dma.done [#allocation6], 1024
    $region29: #{_forward_impl.1} parent=1 // pred_fallthru
      _
    %v50 = vld [vmem:[%s0] sm:$0xff]
    %v51 = vpack.c.bf16 %v50, %v50
    %v52 = vld [vmem:[#allocation2] sm:$0xf]
    %v53 = vld [vmem:[#allocation2 + $0x4] sm:$0xf]
    %v54 = vld [vmem:[#allocation2 + $0x8] sm:$0xf]
    %v55 = vld [vmem:[#allocation2 + $0xc] sm:$0xf]
    %v56 = vld [vmem:[#allocation2 + $0x10] sm:$0xf]
    %v57 = vld [vmem:[#allocation2 + $0x14] sm:$0xf]
    %v58 = vld [vmem:[#allocation2 + $0x18] sm:$0xf]
    %v59 = vld [vmem:[#allocation2 + $0x1c] sm:$0xf]
    %v60 = vld [vmem:[#allocation2 + $0x20] sm:$0xf]
    %v61 = vld [vmem:[#allocation2 + $0x24] sm:$0xf]
    %v62 = vld [vmem:[#allocation2 + $0x28] sm:$0xf]
    %v63 = vld [vmem:[#allocation2 + $0x2c] sm:$0xf]
    %v64 = vld [vmem:[#allocation2 + $0x30] sm:$0xf]
    %v65 = vld [vmem:[#allocation2 + $0x34] sm:$0xf]
    %v66 = vld [vmem:[#allocation2 + $0x38] sm:$0xf]
    %v67 = vld [vmem:[#allocation2 + $0x3c] sm:$0xf]
    %v68 = vld [vmem:[%s2] sm:$0x1]
    %v70 = vlaneseq
    %v71 = vshrl.u32 %v70, 7
    %v72 = vsub.s32 0, %v71
    %v73 = vrot.slane %v68, %v72
    %v91 = vunpack.c.l.b16 %v52
    %v92 = vunpack.c.l.b16 %v53
    %v93 = vunpack.c.l.b16 %v54
    %v94 = vunpack.c.l.b16 %v55
    %v95 = vunpack.c.l.b16 %v56
    %v96 = vunpack.c.l.b16 %v57
    %v97 = vunpack.c.l.b16 %v58
    %v98 = vunpack.c.l.b16 %v59
    %v99 = vunpack.c.l.b16 %v60
    %v100 = vunpack.c.l.b16 %v61
    %v101 = vunpack.c.l.b16 %v62
    %v102 = vunpack.c.l.b16 %v63
    %v103 = vunpack.c.l.b16 %v64
    %v104 = vunpack.c.l.b16 %v65
    %v105 = vunpack.c.l.b16 %v66
    %v106 = vunpack.c.l.b16 %v67
    %v107 = vpack.c.b16 %v92, %v91
    %v108 = vpack.c.b16 %v94, %v93
    %v109 = vpack.c.b16 %v96, %v95
    %v110 = vpack.c.b16 %v98, %v97
    %v111 = vpack.c.b16 %v100, %v99
    %v112 = vpack.c.b16 %v102, %v101
    %v113 = vpack.c.b16 %v104, %v103
    %v114 = vpack.c.b16 %v106, %v105
    %123 = vmatprep.subr.bf16.mxu0 0
    %124 = vmatpush1.bf16.msra.mxu0 %v107
    %125 = vmatprep.subr.bf16.mxu0 0
    %126 = vmatpush1.bf16.msra.mxu0 %v108
    %127 = vmatprep.subr.bf16.mxu0 0
    %128 = vmatpush1.bf16.msra.mxu0 %v109
    %129 = vmatprep.subr.bf16.mxu0 0
    %130 = vmatpush1.bf16.msra.mxu0 %v110
    %131 = vmatprep.subr.bf16.mxu0 0
    %132 = vmatpush1.bf16.msra.mxu0 %v111
    %133 = vmatprep.subr.bf16.mxu0 0
    %134 = vmatpush1.bf16.msra.mxu0 %v112
    %135 = vmatprep.subr.bf16.mxu0 0
    %136 = vmatpush1.bf16.msra.mxu0 %v113
    %137 = vmatprep.subr.bf16.mxu0 0
    %138 = vmatpush1.bf16.msra.mxu0 %v114
    %139 = vmatprep.subr.bf16.mxu0 0
    %140 = vmatpush1.bf16.msra.mxu0 0
    %141 = vmatprep.subr.bf16.mxu0 0
    %142 = vmatpush1.bf16.msra.mxu0 0
    %143 = vmatprep.subr.bf16.mxu0 0
    %144 = vmatpush1.bf16.msra.mxu0 0
    %145 = vmatprep.subr.bf16.mxu0 0
    %146 = vmatpush1.bf16.msra.mxu0 0
    %147 = vmatprep.subr.bf16.mxu0 0
    %148 = vmatpush1.bf16.msra.mxu0 0
    %149 = vmatprep.subr.bf16.mxu0 0
    %150 = vmatpush1.bf16.msra.mxu0 0
    %151 = vmatprep.subr.bf16.mxu0 0
    %152 = vmatpush1.bf16.msra.mxu0 0
    %153 = vmatprep.subr.bf16.mxu0 0
    %154 = vmatpush1.bf16.msra.mxu0 0
    %155 = vmatprep.mubr.bf16.mxu0 0
    %156 = vmatmul.mubr.bf16.gmra.mrb[0].mxu0 %v51
    %v157 = vpop.f32.mrb[0].mxu0
    %v158 = vadd.f32 %v73, %v157
    %v159 = vpop.f32.mrb[0].mxu0
    %v160 = vpop.f32.mrb[0].mxu0
    %v161 = vpop.f32.mrb[0].mxu0
    %162 = vdwg.mxu0
    %v163 = vmax.f32 %v158, 0.0
    %v164 = vpack.c.bf16 %v163, %v163
    %v165 = vld [vmem:[#allocation5] sm:$0xf]
    %v166 = vld [vmem:[#allocation5 + $0x4] sm:$0xf]
    %v167 = vld [vmem:[#allocation5 + $0x8] sm:$0xf]
    %v168 = vld [vmem:[#allocation5 + $0xc] sm:$0xf]
    %v169 = vld [vmem:[#allocation5 + $0x10] sm:$0xf]
    %v170 = vld [vmem:[#allocation5 + $0x14] sm:$0xf]
    %v171 = vld [vmem:[#allocation5 + $0x18] sm:$0xf]
    %v172 = vld [vmem:[#allocation5 + $0x1c] sm:$0xf]
    %v173 = vld [vmem:[#allocation5 + $0x20] sm:$0xf]
    %v174 = vld [vmem:[#allocation5 + $0x24] sm:$0xf]
    %v175 = vld [vmem:[#allocation5 + $0x28] sm:$0xf]
    %v176 = vld [vmem:[#allocation5 + $0x2c] sm:$0xf]
    %v177 = vld [vmem:[#allocation5 + $0x30] sm:$0xf]
    %v178 = vld [vmem:[#allocation5 + $0x34] sm:$0xf]
    %v179 = vld [vmem:[#allocation5 + $0x38] sm:$0xf]
    %v180 = vld [vmem:[#allocation5 + $0x3c] sm:$0xf]
    %v181 = vld [vmem:[%s4] sm:$0x1]
    %v183 = vlaneseq
    %v184 = vshrl.u32 %v183, 7
    %v185 = vsub.s32 0, %v184
    %v186 = vrot.slane %v181, %v185
    %v204 = vunpack.c.l.b16 %v165
    %v205 = vunpack.c.l.b16 %v166
    %v206 = vunpack.c.l.b16 %v167
    %v207 = vunpack.c.l.b16 %v168
    %v208 = vunpack.c.l.b16 %v169
    %v209 = vunpack.c.l.b16 %v170
    %v210 = vunpack.c.l.b16 %v171
    %v211 = vunpack.c.l.b16 %v172
    %v212 = vunpack.c.l.b16 %v173
    %v213 = vunpack.c.l.b16 %v174
    %v214 = vunpack.c.l.b16 %v175
    %v215 = vunpack.c.l.b16 %v176
    %v216 = vunpack.c.l.b16 %v177
    %v217 = vunpack.c.l.b16 %v178
    %v218 = vunpack.c.l.b16 %v179
    %v219 = vunpack.c.l.b16 %v180
    %v220 = vpack.c.b16 %v205, %v204
    %v221 = vpack.c.b16 %v207, %v206
    %v222 = vpack.c.b16 %v209, %v208
    %v223 = vpack.c.b16 %v211, %v210
    %v224 = vpack.c.b16 %v213, %v212
    %v225 = vpack.c.b16 %v215, %v214
    %v226 = vpack.c.b16 %v217, %v216
    %v227 = vpack.c.b16 %v219, %v218
    %236 = vmatprep.subr.bf16.mxu0 0
    %237 = vmatpush1.bf16.msra.mxu0 %v220
    %238 = vmatprep.subr.bf16.mxu0 0
    %239 = vmatpush1.bf16.msra.mxu0 %v221
    %240 = vmatprep.subr.bf16.mxu0 0
    %241 = vmatpush1.bf16.msra.mxu0 %v222
    %242 = vmatprep.subr.bf16.mxu0 0
    %243 = vmatpush1.bf16.msra.mxu0 %v223
    %244 = vmatprep.subr.bf16.mxu0 0
    %245 = vmatpush1.bf16.msra.mxu0 %v224
    %246 = vmatprep.subr.bf16.mxu0 0
    %247 = vmatpush1.bf16.msra.mxu0 %v225
    %248 = vmatprep.subr.bf16.mxu0 0
    %249 = vmatpush1.bf16.msra.mxu0 %v226
    %250 = vmatprep.subr.bf16.mxu0 0
    %251 = vmatpush1.bf16.msra.mxu0 %v227
    %252 = vmatprep.subr.bf16.mxu0 0
    %253 = vmatpush1.bf16.msra.mxu0 0
    %254 = vmatprep.subr.bf16.mxu0 0
    %255 = vmatpush1.bf16.msra.mxu0 0
    %256 = vmatprep.subr.bf16.mxu0 0
    %257 = vmatpush1.bf16.msra.mxu0 0
    %258 = vmatprep.subr.bf16.mxu0 0
    %259 = vmatpush1.bf16.msra.mxu0 0
    %260 = vmatprep.subr.bf16.mxu0 0
    %261 = vmatpush1.bf16.msra.mxu0 0
    %262 = vmatprep.subr.bf16.mxu0 0
    %263 = vmatpush1.bf16.msra.mxu0 0
    %264 = vmatprep.subr.bf16.mxu0 0
    %265 = vmatpush1.bf16.msra.mxu0 0
    %266 = vmatprep.subr.bf16.mxu0 0
    %267 = vmatpush1.bf16.msra.mxu0 0
    %268 = vmatprep.mubr.bf16.mxu0 0
    %269 = vmatmul.mubr.bf16.gmra.mrb[0].mxu0 %v164
    %v270 = vpop.f32.mrb[0].mxu0
    %v271 = vadd.f32 %v186, %v270
    %v272 = vpop.f32.mrb[0].mxu0
    %v273 = vpop.f32.mrb[0].mxu0
    %v274 = vpop.f32.mrb[0].mxu0
    %275 = vdwg.mxu0
    %276 = vst [vmem:[#allocation7] sm:$0xff] %v271
    // Predicated region
    $region30: #{_forward_impl.1} parent=1 // pred_check
      _
    $region31: #{_forward_impl.1} parent=1 // pred_check_branch
      %278 = sbr.rel (0) target = $region33
    $region32: #{_forward_impl.1} parent=1 // pred_region
      %s280 = ssub.s32 128, 128
      %281 = vsyncadd [#allocation4], %s280
      %s283 = sshll.u32 [#allocation7], 4
      %s284 = int_to_ptr.vmem [resolvable:$true] %s283
      %286 = dma.vmem_to_hbm [thread:$0]  %s284, 128, %s5, [#allocation4]
    $region33: #{_forward_impl.1} parent=1 // pred_fallthru
      _
    // Predicated region
    $region34: #{_forward_impl.1} parent=1 // pred_check
      _
    $region35: #{_forward_impl.1} parent=1 // pred_check_branch
      %288 = sbr.rel (0) target = $region37
    $region36: #{_forward_impl.1} parent=1 // pred_region
      %289 = dma.done [#allocation4], 128
    $region37: #{_forward_impl.1} parent=1 // pred_fallthru
      _
    %290 = vsyncpa [#allocation3], 1
    %291 = vsyncpa [#allocation6], 1
    %292 = vsyncpa [#allocation4], 1

</llo_original>
